<compile_context>
chip_gen: v6e
topology: v6e:2x2x1
jax: 0.10.0
libtpu: 0.0.40
codegen_flags: <defaults>
</compile_context>

<pallas_src>
import jax
import jax.numpy as jnp
from jax.experimental import pallas as pl
from jax.experimental.pallas import tpu as pltpu

NZ = 100
HIDDEN = [64, 16]
OUTPUT_SIZE = (1, 28, 28)
OUT_DIM = OUTPUT_SIZE[0] * OUTPUT_SIZE[1] * OUTPUT_SIZE[2]  # 784
EPS = 1e-5  # PyTorch BatchNorm1d default eps


def _batchnorm_train(h, gamma, beta):
    """Training-mode BatchNorm1d folded into a single scale/shift per feature."""
    mu = jnp.mean(h, axis=0, keepdims=True)
    var = jnp.mean((h - mu) ** 2, axis=0, keepdims=True)  # biased variance
    s = gamma * jax.lax.rsqrt(var + EPS)
    t = beta - mu * s
    return h * s + t


def _sigmoid(o):
    return 1.0 / (1.0 + jnp.exp(-o))


# --------------------------------------------------------------------------
# Kernels
# --------------------------------------------------------------------------
def fused_kernel(x_ref,
                 w1_ref, b1_ref, g1_ref, be1_ref,
                 w2_ref, b2_ref, g2_ref, be2_ref,
                 w3_ref, b3_ref,
                 out_ref):
    """Whole forward pass for the full batch (small-batch fast path)."""
    x = x_ref[...].astype(jnp.float32)

    h = jnp.dot(x, w1_ref[...], preferred_element_type=jnp.float32) + b1_ref[...]
    h = jnp.maximum(h, 0.0)
    h = _batchnorm_train(h, g1_ref[...], be1_ref[...])

    h = jnp.dot(h, w2_ref[...], preferred_element_type=jnp.float32) + b2_ref[...]
    h = jnp.maximum(h, 0.0)
    h = _batchnorm_train(h, g2_ref[...], be2_ref[...])

    o = jnp.dot(h, w3_ref[...], preferred_element_type=jnp.float32) + b3_ref[...]
    out_ref[...] = _sigmoid(o).astype(out_ref.dtype)


def stage1_kernel(x_ref,
                  w1_ref, b1_ref, g1_ref, be1_ref,
                  w2_ref, b2_ref, g2_ref, be2_ref,
                  h2_ref):
    """Full-batch: Linear(nz,64)+ReLU+BN, Linear(64,16)+ReLU+BN -> (B,16)."""
    x = x_ref[...].astype(jnp.float32)

    h = jnp.dot(x, w1_ref[...], preferred_element_type=jnp.float32) + b1_ref[...]
    h = jnp.maximum(h, 0.0)
    h = _batchnorm_train(h, g1_ref[...], be1_ref[...])

    h = jnp.dot(h, w2_ref[...], preferred_element_type=jnp.float32) + b2_ref[...]
    h = jnp.maximum(h, 0.0)
    h = _batchnorm_train(h, g2_ref[...], be2_ref[...])

    h2_ref[...] = h.astype(h2_ref.dtype)


def stage2_kernel(h2_ref, w3_ref, b3_ref, out_ref):
    """Per batch-tile: Linear(16,784) + Sigmoid (pipelined output writeback)."""
    o = jnp.dot(h2_ref[...], w3_ref[...],
                preferred_element_type=jnp.float32) + b3_ref[...]
    out_ref[...] = _sigmoid(o).astype(out_ref.dtype)


# --------------------------------------------------------------------------
# Wrapper
# --------------------------------------------------------------------------
def _full_spec(shape):
    # whole-array block (no grid), resident in VMEM
    return pl.BlockSpec(shape, lambda: (0,) * len(shape))


def _pick_row_tile(batch, max_rows):
    """Row tile for the layer-3 grid: full batch if small, else a multiple of 8."""
    if batch <= max_rows:
        return batch                       # block dim == full array dim: always legal
    assert max_rows % 8 == 0, "row tile must be a multiple of 8"
    return max_rows                        # edge block (if any) is masked by Pallas


def generator_fc_forward(x, params, *, out_dtype=jnp.float32,
                         fuse_max_batch=512, row_tile=512):
    """x: (B, NZ) float32 -> (B, 1, 28, 28)."""
    B = x.shape[0]

    stage1_inputs = (
        x,
        params["w1"], params["b1"], params["g1"], params["be1"],
        params["w2"], params["b2"], params["g2"], params["be2"],
    )

    if B <= fuse_max_batch:
        # ---- Small batch: single fused kernel, everything resident in VMEM ----
        fused_inputs = stage1_inputs + (params["w3"], params["b3"])
        out_flat = pl.pallas_call(
            fused_kernel,
            out_shape=jax.ShapeDtypeStruct((B, OUT_DIM), out_dtype),
            in_specs=[_full_spec(a.shape) for a in fused_inputs],
            out_specs=_full_spec((B, OUT_DIM)),
        )(*fused_inputs)
        return out_flat.reshape(-1, *OUTPUT_SIZE)

    # ---- Stage 1: layers 1-2 + BatchNorms over the full batch (tiny output) ----
    h2 = pl.pallas_call(
        stage1_kernel,
        out_shape=jax.ShapeDtypeStruct((B, HIDDEN[1]), jnp.float32),
        in_specs=[_full_spec(a.shape) for a in stage1_inputs],
        out_specs=_full_spec((B, HIDDEN[1])),
    )(*stage1_inputs)

    # ---- Stage 2: 16 -> 784 matmul + sigmoid, tiled over batch ----
    tm = _pick_row_tile(B, row_tile)
    grid = (pl.cdiv(B, tm),)
    out_flat = pl.pallas_call(
        stage2_kernel,
        out_shape=jax.ShapeDtypeStruct((B, OUT_DIM), out_dtype),
        grid=grid,
        in_specs=[
            pl.BlockSpec((tm, HIDDEN[1]), lambda i: (i, 0)),       # activations: tiled
            pl.BlockSpec((HIDDEN[1], OUT_DIM), lambda i: (0, 0)),  # w3: resident
            pl.BlockSpec((1, OUT_DIM), lambda i: (0, 0)),          # b3: resident
        ],
        out_specs=pl.BlockSpec((tm, OUT_DIM), lambda i: (i, 0)),
        compiler_params=pltpu.CompilerParams(
            dimension_semantics=("parallel",),  # megacore sharding on v7x
        ),
    )(h2, params["w3"], params["b3"])

    return out_flat.reshape(-1, *OUTPUT_SIZE)


# --------------------------------------------------------------------------
# Pure-JAX reference (for correctness checking only)
# --------------------------------------------------------------------------
def reference_forward(x, params):
    h = jnp.maximum(jnp.dot(x, params["w1"],
                            preferred_element_type=jnp.float32) + params["b1"], 0.0)
    h = _batchnorm_train(h, params["g1"], params["be1"])
    h = jnp.maximum(jnp.dot(h, params["w2"],
                            preferred_element_type=jnp.float32) + params["b2"], 0.0)
    h = _batchnorm_train(h, params["g2"], params["be2"])
    o = jnp.dot(h, params["w3"],
                preferred_element_type=jnp.float32) + params["b3"]
    return _sigmoid(o).reshape(-1, *OUTPUT_SIZE)


# --------------------------------------------------------------------------
# Params (deterministic PyTorch-style init)
# --------------------------------------------------------------------------
def init_params(key):
    """Linear: U(-1/sqrt(fan_in), +1/sqrt(fan_in)); BatchNorm: gamma=1, beta=0."""
    ks = jax.random.split(key, 6)

    def linear(kw, kb, fan_in, fan_out):
        bound = 1.0 / jnp.sqrt(jnp.float32(fan_in))
        w = jax.random.uniform(kw, (fan_in, fan_out), jnp.float32, -bound, bound)
        b = jax.random.uniform(kb, (1, fan_out), jnp.float32, -bound, bound)
        return w, b

    w1, b1 = linear(ks[0], ks[1], NZ, HIDDEN[0])
    w2, b2 = linear(ks[2], ks[3], HIDDEN[0], HIDDEN[1])
    w3, b3 = linear(ks[4], ks[5], HIDDEN[1], OUT_DIM)
    return {
        "w1": w1, "b1": b1,
        "g1": jnp.ones((1, HIDDEN[0]), jnp.float32),
        "be1": jnp.zeros((1, HIDDEN[0]), jnp.float32),
        "w2": w2, "b2": b2,
        "g2": jnp.ones((1, HIDDEN[1]), jnp.float32),
        "be2": jnp.zeros((1, HIDDEN[1]), jnp.float32),
        "w3": w3, "b3": b3,
    }


if __name__ == "__main__":
    key = jax.random.PRNGKey(0)
    kx, kx2, kp = jax.random.split(key, 3)
    params = init_params(kp)

    def check(out, x):
        assert out.shape == (x.shape[0], *OUTPUT_SIZE), out.shape
        assert bool(jnp.all(jnp.isfinite(out)))
        assert bool(jnp.all((out >= 0.0) & (out <= 1.0)))   # sigmoid range
        ref = reference_forward(x, params)
        assert bool(jnp.allclose(out, ref, rtol=0.0, atol=5e-3))

    # 1) Small-batch fused path.
    B1 = 8
    x1 = jax.random.normal(kx, (B1, NZ), jnp.float32)        # latent z vectors
    out1 = jax.block_until_ready(generator_fc_forward(x1, params))
    check(out1, x1)

    # 2) Two-stage pipelined path (forced, with a 3-step batch grid).
    B2 = 48
    x2 = jax.random.normal(kx2, (B2, NZ), jnp.float32)
    out2 = jax.block_until_ready(
        generator_fc_forward(x2, params, fuse_max_batch=0, row_tile=16))
    check(out2, x2)

    print("KERNEL_OK")
</pallas_src>

<mosaic_0001>
module attributes {stable_mosaic.version = 11 : i64} {
  func.func @fused_kernel(%arg0: memref<8x100xf32, #tpu.memory_space<vmem>>, %arg1: memref<100x64xf32, #tpu.memory_space<vmem>>, %arg2: memref<1x64xf32, #tpu.memory_space<vmem>>, %arg3: memref<1x64xf32, #tpu.memory_space<vmem>>, %arg4: memref<1x64xf32, #tpu.memory_space<vmem>>, %arg5: memref<64x16xf32, #tpu.memory_space<vmem>>, %arg6: memref<1x16xf32, #tpu.memory_space<vmem>>, %arg7: memref<1x16xf32, #tpu.memory_space<vmem>>, %arg8: memref<1x16xf32, #tpu.memory_space<vmem>>, %arg9: memref<16x784xf32, #tpu.memory_space<vmem>>, %arg10: memref<1x784xf32, #tpu.memory_space<vmem>>, %arg11: memref<8x784xf32, #tpu.memory_space<vmem>>) attributes {dimension_semantics = [], scalar_prefetch = 0 : i64, scratch_operands = 0 : i64, tpu.core_type = #tpu.core_type<tc>} {
    %c0 = arith.constant 0 : index
    %c0_0 = arith.constant 0 : index
    %0 = vector.load %arg0[%c0, %c0_0] : memref<8x100xf32, #tpu.memory_space<vmem>>, vector<8x100xf32>
    %c0_1 = arith.constant 0 : index
    %c0_2 = arith.constant 0 : index
    %1 = vector.load %arg1[%c0_1, %c0_2] : memref<100x64xf32, #tpu.memory_space<vmem>>, vector<100x64xf32>
    %cst = arith.constant dense<0.000000e+00> : vector<8x64xf32>
    %2 = tpu.matmul %0, %1, %cst {dimension_numbers = #tpu.dot_dimension_numbers<[1], [0], [0], [1], [0, 0, 1, 1], [], []>} : vector<8x100xf32>, vector<100x64xf32>, vector<8x64xf32> -> vector<8x64xf32>
    %c0_3 = arith.constant 0 : index
    %c0_4 = arith.constant 0 : index
    %3 = vector.load %arg2[%c0_3, %c0_4] : memref<1x64xf32, #tpu.memory_space<vmem>>, vector<1x64xf32>
    %4 = vector.broadcast %3 : vector<1x64xf32> to vector<8x64xf32>
    %5 = arith.addf %2, %4 : vector<8x64xf32>
    %cst_5 = arith.constant 0.000000e+00 : f32
    %6 = vector.broadcast %cst_5 : f32 to vector<8x64xf32>
    %7 = arith.maximumf %5, %6 : vector<8x64xf32>
    %c0_6 = arith.constant 0 : index
    %c0_7 = arith.constant 0 : index
    %8 = vector.load %arg3[%c0_6, %c0_7] : memref<1x64xf32, #tpu.memory_space<vmem>>, vector<1x64xf32>
    %c0_8 = arith.constant 0 : index
    %c0_9 = arith.constant 0 : index
    %9 = vector.load %arg4[%c0_8, %c0_9] : memref<1x64xf32, #tpu.memory_space<vmem>>, vector<1x64xf32>
    %cst_10 = arith.constant dense<0.000000e+00> : vector<64xf32>
    %10 = vector.multi_reduction <add>, %7, %cst_10 [0] : vector<8x64xf32> to vector<64xf32>
    %11 = vector.shape_cast %10 : vector<64xf32> to vector<1x64xf32>
    %cst_11 = arith.constant 8.000000e+00 : f32
    %12 = vector.broadcast %cst_11 : f32 to vector<1x64xf32>
    %13 = arith.divf %11, %12 : vector<1x64xf32>
    %14 = vector.broadcast %13 : vector<1x64xf32> to vector<8x64xf32>
    %15 = arith.subf %7, %14 : vector<8x64xf32>
    %16 = arith.mulf %15, %15 : vector<8x64xf32>
    %cst_12 = arith.constant dense<0.000000e+00> : vector<64xf32>
    %17 = vector.multi_reduction <add>, %16, %cst_12 [0] : vector<8x64xf32> to vector<64xf32>
    %18 = vector.shape_cast %17 : vector<64xf32> to vector<1x64xf32>
    %cst_13 = arith.constant 8.000000e+00 : f32
    %19 = vector.broadcast %cst_13 : f32 to vector<1x64xf32>
    %20 = arith.divf %18, %19 : vector<1x64xf32>
    %cst_14 = arith.constant 9.99999974E-6 : f32
    %21 = vector.broadcast %cst_14 : f32 to vector<1x64xf32>
    %22 = arith.addf %20, %21 : vector<1x64xf32>
    %23 = math.rsqrt %22 : vector<1x64xf32>
    %24 = arith.mulf %8, %23 : vector<1x64xf32>
    %25 = arith.mulf %13, %24 : vector<1x64xf32>
    %26 = arith.subf %9, %25 : vector<1x64xf32>
    %27 = vector.broadcast %24 : vector<1x64xf32> to vector<8x64xf32>
    %28 = arith.mulf %7, %27 : vector<8x64xf32>
    %29 = vector.broadcast %26 : vector<1x64xf32> to vector<8x64xf32>
    %30 = arith.addf %28, %29 : vector<8x64xf32>
    %c0_15 = arith.constant 0 : index
    %c0_16 = arith.constant 0 : index
    %31 = vector.load %arg5[%c0_15, %c0_16] : memref<64x16xf32, #tpu.memory_space<vmem>>, vector<64x16xf32>
    %cst_17 = arith.constant dense<0.000000e+00> : vector<8x16xf32>
    %32 = tpu.matmul %30, %31, %cst_17 {dimension_numbers = #tpu.dot_dimension_numbers<[1], [0], [0], [1], [0, 0, 1, 1], [], []>} : vector<8x64xf32>, vector<64x16xf32>, vector<8x16xf32> -> vector<8x16xf32>
    %c0_18 = arith.constant 0 : index
    %c0_19 = arith.constant 0 : index
    %33 = vector.load %arg6[%c0_18, %c0_19] : memref<1x16xf32, #tpu.memory_space<vmem>>, vector<1x16xf32>
    %34 = vector.broadcast %33 : vector<1x16xf32> to vector<8x16xf32>
    %35 = arith.addf %32, %34 : vector<8x16xf32>
    %cst_20 = arith.constant 0.000000e+00 : f32
    %36 = vector.broadcast %cst_20 : f32 to vector<8x16xf32>
    %37 = arith.maximumf %35, %36 : vector<8x16xf32>
    %c0_21 = arith.constant 0 : index
    %c0_22 = arith.constant 0 : index
    %38 = vector.load %arg7[%c0_21, %c0_22] : memref<1x16xf32, #tpu.memory_space<vmem>>, vector<1x16xf32>
    %c0_23 = arith.constant 0 : index
    %c0_24 = arith.constant 0 : index
    %39 = vector.load %arg8[%c0_23, %c0_24] : memref<1x16xf32, #tpu.memory_space<vmem>>, vector<1x16xf32>
    %cst_25 = arith.constant dense<0.000000e+00> : vector<16xf32>
    %40 = vector.multi_reduction <add>, %37, %cst_25 [0] : vector<8x16xf32> to vector<16xf32>
    %41 = vector.shape_cast %40 : vector<16xf32> to vector<1x16xf32>
    %cst_26 = arith.constant 8.000000e+00 : f32
    %42 = vector.broadcast %cst_26 : f32 to vector<1x16xf32>
    %43 = arith.divf %41, %42 : vector<1x16xf32>
    %44 = vector.broadcast %43 : vector<1x16xf32> to vector<8x16xf32>
    %45 = arith.subf %37, %44 : vector<8x16xf32>
    %46 = arith.mulf %45, %45 : vector<8x16xf32>
    %cst_27 = arith.constant dense<0.000000e+00> : vector<16xf32>
    %47 = vector.multi_reduction <add>, %46, %cst_27 [0] : vector<8x16xf32> to vector<16xf32>
    %48 = vector.shape_cast %47 : vector<16xf32> to vector<1x16xf32>
    %cst_28 = arith.constant 8.000000e+00 : f32
    %49 = vector.broadcast %cst_28 : f32 to vector<1x16xf32>
    %50 = arith.divf %48, %49 : vector<1x16xf32>
    %cst_29 = arith.constant 9.99999974E-6 : f32
    %51 = vector.broadcast %cst_29 : f32 to vector<1x16xf32>
    %52 = arith.addf %50, %51 : vector<1x16xf32>
    %53 = math.rsqrt %52 : vector<1x16xf32>
    %54 = arith.mulf %38, %53 : vector<1x16xf32>
    %55 = arith.mulf %43, %54 : vector<1x16xf32>
    %56 = arith.subf %39, %55 : vector<1x16xf32>
    %57 = vector.broadcast %54 : vector<1x16xf32> to vector<8x16xf32>
    %58 = arith.mulf %37, %57 : vector<8x16xf32>
    %59 = vector.broadcast %56 : vector<1x16xf32> to vector<8x16xf32>
    %60 = arith.addf %58, %59 : vector<8x16xf32>
    %c0_30 = arith.constant 0 : index
    %c0_31 = arith.constant 0 : index
    %61 = vector.load %arg9[%c0_30, %c0_31] : memref<16x784xf32, #tpu.memory_space<vmem>>, vector<16x784xf32>
    %cst_32 = arith.constant dense<0.000000e+00> : vector<8x784xf32>
    %62 = tpu.matmul %60, %61, %cst_32 {dimension_numbers = #tpu.dot_dimension_numbers<[1], [0], [0], [1], [0, 0, 1, 1], [], []>} : vector<8x16xf32>, vector<16x784xf32>, vector<8x784xf32> -> vector<8x784xf32>
    %c0_33 = arith.constant 0 : index
    %c0_34 = arith.constant 0 : index
    %63 = vector.load %arg10[%c0_33, %c0_34] : memref<1x784xf32, #tpu.memory_space<vmem>>, vector<1x784xf32>
    %64 = vector.broadcast %63 : vector<1x784xf32> to vector<8x784xf32>
    %65 = arith.addf %62, %64 : vector<8x784xf32>
    %cst_35 = arith.constant 0.000000e+00 : f32
    %66 = vector.broadcast %cst_35 : f32 to vector<8x784xf32>
    %67 = arith.subf %66, %65 : vector<8x784xf32>
    %68 = math.exp %67 : vector<8x784xf32>
    %cst_36 = arith.constant 1.000000e+00 : f32
    %69 = vector.broadcast %cst_36 : f32 to vector<8x784xf32>
    %70 = arith.addf %69, %68 : vector<8x784xf32>
    %cst_37 = arith.constant 1.000000e+00 : f32
    %71 = vector.broadcast %cst_37 : f32 to vector<8x784xf32>
    %72 = arith.divf %71, %70 : vector<8x784xf32>
    %c0_38 = arith.constant 0 : index
    %c0_39 = arith.constant 0 : index
    %73 = vector.load %arg11[%c0_38, %c0_39] : memref<8x784xf32, #tpu.memory_space<vmem>>, vector<8x784xf32>
    tpu.vector_store %arg11[%c0_38, %c0_39], %72 {strides = array<i32>} : memref<8x784xf32, #tpu.memory_space<vmem>>, vector<8x784xf32>,
    return
  }
}

</mosaic_0001>

<llo_original>
// kernel: tpu_custom_call.1
$region0: #{tpu_custom_call.1}
  #allocation0 [shape = 'u32[]', space=smem, size = 0x4, offset = 0x4, fixed_abs, tag = 'smem constant byte address 0x4 - core index']
  #allocation1 [shape = 'u32[144,128]{1,0:T(1,128)}', space=vmem, size = 0x12000, scoped, tag = 'internal scratch']
  %s0 = inlined_call_operand.vmem [shape: f32[8,100], index: 0, kind: input, shape index: {}]
  %s1 = inlined_call_operand.vmem [shape: f32[100,64], index: 1, kind: input, shape index: {}]
  %s2 = inlined_call_operand.vmem [shape: f32[1,64], index: 2, kind: input, shape index: {}]
  %s3 = inlined_call_operand.vmem [shape: f32[1,64], index: 3, kind: input, shape index: {}]
  %s4 = inlined_call_operand.vmem [shape: f32[1,64], index: 4, kind: input, shape index: {}]
  %s5 = inlined_call_operand.vmem [shape: f32[64,16], index: 5, kind: input, shape index: {}]
  %s6 = inlined_call_operand.vmem [shape: f32[1,16], index: 6, kind: input, shape index: {}]
  %s7 = inlined_call_operand.vmem [shape: f32[1,16], index: 7, kind: input, shape index: {}]
  %s8 = inlined_call_operand.vmem [shape: f32[1,16], index: 8, kind: input, shape index: {}]
  %s9 = inlined_call_operand.vmem [shape: f32[16,784], index: 9, kind: input, shape index: {}]
  %s10 = inlined_call_operand.vmem [shape: f32[1,784], index: 10, kind: input, shape index: {}]
  %s11 = inlined_call_operand.hbm [shape: f32[8,784], index: 11, kind: output, shape index: {}]
  %s12 = sld [smem:[#allocation0]]
  $region54: #{tpu_custom_call.1} parent=0
    _
  %s14 = ssub.s32 1, %s12
  %s15 = scalar_select 0, %s14, %s12
  $region1: #{tpu_custom_call.1} parent=0
    #allocation2 [shape = 'u8[28672]{0}', space=vmem, size = 0x7000, scoped, tag = 'output window, operand 0, single buffered']
    #allocation3 [shape = 's32[1]{0}', space=sflag, size = 0x4, scoped, tag = 'scoped memory for tpu_custom_call.1']
    %16 = vsyncpa [#allocation3], 0
    // Predicated region
    $region2: #{tpu_custom_call.1} parent=1 // pred_check
      _
    $region3: #{tpu_custom_call.1} parent=1 // pred_check_branch
      %18 = sbr.rel (0) target = $region5
    $region4: #{tpu_custom_call.1} parent=1 // pred_region
      _
    $region5: #{tpu_custom_call.1} parent=1 // pred_fallthru
      _
    // Predicated region
    $region6: #{tpu_custom_call.1} parent=1 // pred_check
      _
    $region7: #{tpu_custom_call.1} parent=1 // pred_check_branch
      %20 = sbr.rel (0) target = $region9
    $region8: #{tpu_custom_call.1} parent=1 // pred_region
      _
    $region9: #{tpu_custom_call.1} parent=1 // pred_fallthru
      _
    // Predicated region
    $region10: #{tpu_custom_call.1} parent=1 // pred_check
      _
    $region11: #{tpu_custom_call.1} parent=1 // pred_check_branch
      %22 = sbr.rel (0) target = $region13
    $region12: #{tpu_custom_call.1} parent=1 // pred_region
      _
    $region13: #{tpu_custom_call.1} parent=1 // pred_fallthru
      _
    // Predicated region
    $region14: #{tpu_custom_call.1} parent=1 // pred_check
      _
    $region15: #{tpu_custom_call.1} parent=1 // pred_check_branch
      %24 = sbr.rel (0) target = $region17
    $region16: #{tpu_custom_call.1} parent=1 // pred_region
      _
    $region17: #{tpu_custom_call.1} parent=1 // pred_fallthru
      _
    // Predicated region
    $region18: #{tpu_custom_call.1} parent=1 // pred_check
      _
    $region19: #{tpu_custom_call.1} parent=1 // pred_check_branch
      %26 = sbr.rel (0) target = $region21
    $region20: #{tpu_custom_call.1} parent=1 // pred_region
      _
    $region21: #{tpu_custom_call.1} parent=1 // pred_fallthru
      _
    // Predicated region
    $region22: #{tpu_custom_call.1} parent=1 // pred_check
      _
    $region23: #{tpu_custom_call.1} parent=1 // pred_check_branch
      %28 = sbr.rel (0) target = $region25
    $region24: #{tpu_custom_call.1} parent=1 // pred_region
      _
    $region25: #{tpu_custom_call.1} parent=1 // pred_fallthru
      _
    // Predicated region
    $region26: #{tpu_custom_call.1} parent=1 // pred_check
      _
    $region27: #{tpu_custom_call.1} parent=1 // pred_check_branch
      %30 = sbr.rel (0) target = $region29
    $region28: #{tpu_custom_call.1} parent=1 // pred_region
      _
    $region29: #{tpu_custom_call.1} parent=1 // pred_fallthru
      _
    // Predicated region
    $region30: #{tpu_custom_call.1} parent=1 // pred_check
      _
    $region31: #{tpu_custom_call.1} parent=1 // pred_check_branch
      %32 = sbr.rel (0) target = $region33
    $region32: #{tpu_custom_call.1} parent=1 // pred_region
      _
    $region33: #{tpu_custom_call.1} parent=1 // pred_fallthru
      _
    // Predicated region
    $region34: #{tpu_custom_call.1} parent=1 // pred_check
      _
    $region35: #{tpu_custom_call.1} parent=1 // pred_check_branch
      %34 = sbr.rel (0) target = $region37
    $region36: #{tpu_custom_call.1} parent=1 // pred_region
      _
    $region37: #{tpu_custom_call.1} parent=1 // pred_fallthru
      _
    // Predicated region
    $region38: #{tpu_custom_call.1} parent=1 // pred_check
      _
    $region39: #{tpu_custom_call.1} parent=1 // pred_check_branch
      %36 = sbr.rel (0) target = $region41
    $region40: #{tpu_custom_call.1} parent=1 // pred_region
      _
    $region41: #{tpu_custom_call.1} parent=1 // pred_fallthru
      _
    // Predicated region
    $region42: #{tpu_custom_call.1} parent=1 // pred_check
      _
    $region43: #{tpu_custom_call.1} parent=1 // pred_check_branch
      %38 = sbr.rel (0) target = $region45
    $region44: #{tpu_custom_call.1} parent=1 // pred_region
      _
    $region45: #{tpu_custom_call.1} parent=1 // pred_fallthru
      _
    %v39 = vld [vmem:[%s0] sm:$0xff]
    %v40 = vld [vmem:[%s1] sm:$0xff]
    %v41 = vld [vmem:[%s1 + $0x8] sm:$0xff]
    %v42 = vld [vmem:[%s1 + $0x10] sm:$0xff]
    %v43 = vld [vmem:[%s1 + $0x18] sm:$0xff]
    %v44 = vld [vmem:[%s1 + $0x20] sm:$0xff]
    %v45 = vld [vmem:[%s1 + $0x28] sm:$0xff]
    %v46 = vld [vmem:[%s1 + $0x30] sm:$0xff]
    %v47 = vld [vmem:[%s1 + $0x38] sm:$0xff]
    %v48 = vld [vmem:[%s1 + $0x40] sm:$0xff]
    %v49 = vld [vmem:[%s1 + $0x48] sm:$0xff]
    %v50 = vld [vmem:[%s1 + $0x50] sm:$0xff]
    %v51 = vld [vmem:[%s1 + $0x58] sm:$0xff]
    %v52 = vld [vmem:[%s1 + $0x60] sm:$0xf]
    %v53 = vld [vmem:[%s2] sm:$0x1]
    %v55 = vlaneseq
    %v56 = vshrl.u32 %v55, 7
    %v57 = vsub.s32 0, %v56
    %v58 = vrot.slane %v53, %v57
    %vm60 = vcmask 818176
    %v62 = vsel %vm60, %v39, 0
    %vm64 = vcmask 1043456
    %v66 = vsel %vm64, %v52, 0
    %68 = vmatprep.subr.mxu0 0.0
    %69 = vmatpush1.msra.mxu0 0.0
    %70 = vmatprep.subr.mxu0 0.0
    %71 = vmatpush1.msra.mxu0 0.0
    %72 = vmatprep.subr.mxu0 0.0
    %73 = vmatpush1.msra.mxu0 0.0
    %74 = vmatprep.subr.mxu0 0.0
    %75 = vmatpush1.msra.mxu0 %v66
    %76 = vmatprep.subr.mxu0 0.0
    %77 = vmatpush1.msra.mxu0 %v51
    %78 = vmatprep.subr.mxu0 0.0
    %79 = vmatpush1.msra.mxu0 %v50
    %80 = vmatprep.subr.mxu0 0.0
    %81 = vmatpush1.msra.mxu0 %v49
    %82 = vmatprep.subr.mxu0 0.0
    %83 = vmatpush1.msra.mxu0 %v48
    %84 = vmatprep.subr.mxu0 0.0
    %85 = vmatpush1.msra.mxu0 %v47
    %86 = vmatprep.subr.mxu0 0.0
    %87 = vmatpush1.msra.mxu0 %v46
    %88 = vmatprep.subr.mxu0 0.0
    %89 = vmatpush1.msra.mxu0 %v45
    %90 = vmatprep.subr.mxu0 0.0
    %91 = vmatpush1.msra.mxu0 %v44
    %92 = vmatprep.subr.mxu0 0.0
    %93 = vmatpush1.msra.mxu0 %v43
    %94 = vmatprep.subr.mxu0 0.0
    %95 = vmatpush1.msra.mxu0 %v42
    %96 = vmatprep.subr.mxu0 0.0
    %97 = vmatpush1.msra.mxu0 %v41
    %98 = vmatprep.subr.mxu0 0.0
    %99 = vmatpush1.msra.mxu0 %v40
    %100 = vmatprep.subr.mxu0 0.0
    %101 = vmatpush2.msra.mxu0 0.0
    %102 = vmatprep.subr.mxu0 0.0
    %103 = vmatpush2.msra.mxu0 0.0
    %104 = vmatprep.subr.mxu0 0.0
    %105 = vmatpush2.msra.mxu0 0.0
    %106 = vmatprep.subr.mxu0 0.0
    %107 = vmatpush2.msra.mxu0 0.0
    %108 = vmatprep.subr.mxu0 0.0
    %109 = vmatpush2.msra.mxu0 0.0
    %110 = vmatprep.subr.mxu0 0.0
    %111 = vmatpush2.msra.mxu0 0.0
    %112 = vmatprep.subr.mxu0 0.0
    %113 = vmatpush2.msra.mxu0 0.0
    %114 = vmatprep.subr.mxu0 0.0
    %115 = vmatpush2.msra.mxu0 0.0
    %116 = vmatprep.subr.mxu0 0.0
    %117 = vmatpush2.msra.mxu0 0.0
    %118 = vmatprep.subr.mxu0 0.0
    %119 = vmatpush2.msra.mxu0 0.0
    %120 = vmatprep.subr.mxu0 0.0
    %121 = vmatpush2.msra.mxu0 0.0
    %122 = vmatprep.subr.mxu0 0.0
    %123 = vmatpush2.msra.mxu0 0.0
    %124 = vmatprep.subr.mxu0 0.0
    %125 = vmatpush2.msra.mxu0 0.0
    %126 = vmatprep.subr.mxu0 0.0
    %127 = vmatpush2.msra.mxu0 0.0
    %128 = vmatprep.subr.mxu0 0.0
    %129 = vmatpush2.msra.mxu0 0.0
    %130 = vmatprep.subr.mxu0 0.0
    %131 = vmatpush2.msra.mxu0 0.0
    %132 = vmatprep.mubr.f32.mxu0 0.0
    %133 = vmatmul.mubr.f32.gmra.mxu0 %v62
    %v134 = vpop.f32.mrf.mxu0
    %v135 = vadd.f32 %v58, %v134
    %v136 = vpop.f32.mrf.mxu0
    %137 = vdwg.mxu0
    %v138 = vmax.f32 %v135, 0.0
    %v139 = vld [vmem:[%s3] sm:$0x1]
    %v140 = vld [vmem:[%s4] sm:$0x1]
    %vm141 = vcmask 523264
    %v142 = vsel %vm141, %v138, 0.0
    %v143 = vrot.slane %v142, 4
    %v144 = vadd.f32 %v142, %v143
    %v145 = vrot.slane %v144, 2
    %v146 = vadd.f32 %v144, %v145
    %v147 = vrot.slane %v146, 1
    %v148 = vadd.f32 %v146, %v147
    %v149 = vrcp.pop 8.0
    %v150 = vmul.f32 %v148, %v149
    %v151 = vsub.f32 %v138, %v150
    %v152 = vmul.f32 %v151, %v151
    %v153 = vsel %vm141, %v152, 0.0
    %v154 = vrot.slane %v153, 4
    %v155 = vadd.f32 %v153, %v154
    %v156 = vrot.slane %v155, 2
    %v157 = vadd.f32 %v155, %v156
    %v158 = vrot.slane %v157, 1
    %v159 = vadd.f32 %v157, %v158
    %v160 = vmul.f32 %v159, %v149
    %v161 = vadd.f32 %v160, 1e-05
    %v162 = vrsqrt.pop %v161
    %v163 = vmul.f32 %v139, %v162
    %v164 = vmul.f32 %v150, %v163
    %v165 = vsub.f32 %v140, %v164
    %v167 = vlaneseq
    %v168 = vshrl.u32 %v167, 7
    %v169 = vsub.s32 0, %v168
    %v170 = vrot.slane %v163, %v169
    %v172 = vmul.f32 %v138, %v170
    %v174 = vlaneseq
    %v175 = vshrl.u32 %v174, 7
    %v176 = vsub.s32 0, %v175
    %v177 = vrot.slane %v165, %v176
    %v179 = vadd.f32 %v172, %v177
    %v180 = vld [vmem:[%s5] sm:$0xff]
    %v181 = vld [vmem:[%s5 + $0x8] sm:$0xff]
    %v182 = vld [vmem:[%s5 + $0x10] sm:$0xff]
    %v183 = vld [vmem:[%s5 + $0x18] sm:$0xff]
    %v184 = vld [vmem:[%s5 + $0x20] sm:$0xff]
    %v185 = vld [vmem:[%s5 + $0x28] sm:$0xff]
    %v186 = vld [vmem:[%s5 + $0x30] sm:$0xff]
    %v187 = vld [vmem:[%s5 + $0x38] sm:$0xff]
    %v188 = vld [vmem:[%s6] sm:$0x1]
    %v190 = vlaneseq
    %v191 = vshrl.u32 %v190, 7
    %v192 = vsub.s32 0, %v191
    %v193 = vrot.slane %v188, %v192
    %v196 = vsel %vm141, %v179, 0
    %198 = vmatprep.subr.mxu0 0.0
    %199 = vmatpush1.msra.mxu0 0.0
    %200 = vmatprep.subr.mxu0 0.0
    %201 = vmatpush1.msra.mxu0 0.0
    %202 = vmatprep.subr.mxu0 0.0
    %203 = vmatpush1.msra.mxu0 0.0
    %204 = vmatprep.subr.mxu0 0.0
    %205 = vmatpush1.msra.mxu0 0.0
    %206 = vmatprep.subr.mxu0 0.0
    %207 = vmatpush1.msra.mxu0 0.0
    %208 = vmatprep.subr.mxu0 0.0
    %209 = vmatpush1.msra.mxu0 0.0
    %210 = vmatprep.subr.mxu0 0.0
    %211 = vmatpush1.msra.mxu0 0.0
    %212 = vmatprep.subr.mxu0 0.0
    %213 = vmatpush1.msra.mxu0 0.0
    %214 = vmatprep.subr.mxu0 0.0
    %215 = vmatpush1.msra.mxu0 %v187
    %216 = vmatprep.subr.mxu0 0.0
    %217 = vmatpush1.msra.mxu0 %v186
    %218 = vmatprep.subr.mxu0 0.0
    %219 = vmatpush1.msra.mxu0 %v185
    %220 = vmatprep.subr.mxu0 0.0
    %221 = vmatpush1.msra.mxu0 %v184
    %222 = vmatprep.subr.mxu0 0.0
    %223 = vmatpush1.msra.mxu0 %v183
    %224 = vmatprep.subr.mxu0 0.0
    %225 = vmatpush1.msra.mxu0 %v182
    %226 = vmatprep.subr.mxu0 0.0
    %227 = vmatpush1.msra.mxu0 %v181
    %228 = vmatprep.subr.mxu0 0.0
    %229 = vmatpush1.msra.mxu0 %v180
    %230 = vmatprep.subr.mxu0 0.0
    %231 = vmatpush2.msra.mxu0 0.0
    %232 = vmatprep.subr.mxu0 0.0
    %233 = vmatpush2.msra.mxu0 0.0
    %234 = vmatprep.subr.mxu0 0.0
    %235 = vmatpush2.msra.mxu0 0.0
    %236 = vmatprep.subr.mxu0 0.0
    %237 = vmatpush2.msra.mxu0 0.0
    %238 = vmatprep.subr.mxu0 0.0
    %239 = vmatpush2.msra.mxu0 0.0
    %240 = vmatprep.subr.mxu0 0.0
    %241 = vmatpush2.msra.mxu0 0.0
    %242 = vmatprep.subr.mxu0 0.0
    %243 = vmatpush2.msra.mxu0 0.0
    %244 = vmatprep.subr.mxu0 0.0
    %245 = vmatpush2.msra.mxu0 0.0
    %246 = vmatprep.subr.mxu0 0.0
    %247 = vmatpush2.msra.mxu0 0.0
    %248 = vmatprep.subr.mxu0 0.0
    %249 = vmatpush2.msra.mxu0 0.0
    %250 = vmatprep.subr.mxu0 0.0
    %251 = vmatpush2.msra.mxu0 0.0
    %252 = vmatprep.subr.mxu0 0.0
    %253 = vmatpush2.msra.mxu0 0.0
    %254 = vmatprep.subr.mxu0 0.0
    %255 = vmatpush2.msra.mxu0 0.0
    %256 = vmatprep.subr.mxu0 0.0
    %257 = vmatpush2.msra.mxu0 0.0
    %258 = vmatprep.subr.mxu0 0.0
    %259 = vmatpush2.msra.mxu0 0.0
    %260 = vmatprep.subr.mxu0 0.0
    %261 = vmatpush2.msra.mxu0 0.0
    %262 = vmatprep.mubr.f32.mxu0 0.0
    %263 = vmatmul.mubr.f32.gmra.mxu0 %v196
    %v264 = vpop.f32.mrf.mxu0
    %v265 = vadd.f32 %v193, %v264
    %v266 = vpop.f32.mrf.mxu0
    %267 = vdwg.mxu0
    %v268 = vmax.f32 %v265, 0.0
    %v269 = vld [vmem:[%s7] sm:$0x1]
    %v270 = vld [vmem:[%s8] sm:$0x1]
    %vm271 = vcmask 130048
    %v272 = vsel %vm271, %v268, 0.0
    %v273 = vrot.slane %v272, 4
    %v274 = vadd.f32 %v272, %v273
    %v275 = vrot.slane %v274, 2
    %v276 = vadd.f32 %v274, %v275
    %v277 = vrot.slane %v276, 1
    %v278 = vadd.f32 %v276, %v277
    %v279 = vmul.f32 %v278, %v149
    %v280 = vsub.f32 %v268, %v279
    %v281 = vmul.f32 %v280, %v280
    %v282 = vsel %vm271, %v281, 0.0
    %v283 = vrot.slane %v282, 4
    %v284 = vadd.f32 %v282, %v283
    %v285 = vrot.slane %v284, 2
    %v286 = vadd.f32 %v284, %v285
    %v287 = vrot.slane %v286, 1
    %v288 = vadd.f32 %v286, %v287
    %v289 = vmul.f32 %v288, %v149
    %v290 = vadd.f32 %v289, 1e-05
    %v291 = vrsqrt.pop %v290
    %v292 = vmul.f32 %v269, %v291
    %v293 = vmul.f32 %v279, %v292
    %v294 = vsub.f32 %v270, %v293
    %v296 = vlaneseq
    %v297 = vshrl.u32 %v296, 7
    %v298 = vsub.s32 0, %v297
    %v299 = vrot.slane %v292, %v298
    %v301 = vmul.f32 %v268, %v299
    %v303 = vlaneseq
    %v304 = vshrl.u32 %v303, 7
    %v305 = vsub.s32 0, %v304
    %v306 = vrot.slane %v294, %v305
    %v308 = vadd.f32 %v301, %v306
    %v309 = vld [vmem:[%s9] sm:$0xff]
    %v310 = vld [vmem:[%s9 + $0x8] sm:$0xff]
    %v311 = vld [vmem:[%s9 + $0x10] sm:$0xff]
    %v312 = vld [vmem:[%s9 + $0x18] sm:$0xff]
    %v313 = vld [vmem:[%s9 + $0x20] sm:$0xff]
    %v314 = vld [vmem:[%s9 + $0x28] sm:$0xff]
    %v315 = vld [vmem:[%s9 + $0x30] sm:$0xff]
    %v316 = vld [vmem:[%s9 + $0x38] sm:$0xff]
    %v317 = vld [vmem:[%s9 + $0x40] sm:$0xff]
    %v318 = vld [vmem:[%s9 + $0x48] sm:$0xff]
    %v319 = vld [vmem:[%s9 + $0x50] sm:$0xff]
    %v320 = vld [vmem:[%s9 + $0x58] sm:$0xff]
    %v321 = vld [vmem:[%s9 + $0x60] sm:$0xff]
    %v322 = vld [vmem:[%s9 + $0x68] sm:$0xff]
    %v323 = vld [vmem:[%s10] sm:$0x7f]
    %v325 = vlaneseq
    %v326 = vshrl.u32 %v325, 7
    %v327 = vsub.s32 0, %v326
    %v328 = vrot.slane %v323, %v327
    %v329 = vlaneseq
    %v330 = vshrl.u32 %v329, 7
    %v331 = vsub.s32 1, %v330
    %v332 = vrot.slane %v323, %v331
    %v333 = vlaneseq
    %v334 = vshrl.u32 %v333, 7
    %v335 = vsub.s32 2, %v334
    %v336 = vrot.slane %v323, %v335
    %v337 = vlaneseq
    %v338 = vshrl.u32 %v337, 7
    %v339 = vsub.s32 3, %v338
    %v340 = vrot.slane %v323, %v339
    %v341 = vlaneseq
    %v342 = vshrl.u32 %v341, 7
    %v343 = vsub.s32 4, %v342
    %v344 = vrot.slane %v323, %v343
    %v345 = vlaneseq
    %v346 = vshrl.u32 %v345, 7
    %v347 = vsub.s32 5, %v346
    %v348 = vrot.slane %v323, %v347
    %v349 = vlaneseq
    %v350 = vshrl.u32 %v349, 7
    %v351 = vsub.s32 6, %v350
    %v352 = vrot.slane %v323, %v351
    %v361 = vsel %vm271, %v308, 0
    %363 = vmatprep.subr.mxu0 0.0
    %364 = vmatpush1.msra.mxu0 0.0
    %365 = vmatprep.subr.mxu0 0.0
    %366 = vmatpush1.msra.mxu0 0.0
    %367 = vmatprep.subr.mxu0 0.0
    %368 = vmatpush1.msra.mxu0 0.0
    %369 = vmatprep.subr.mxu0 0.0
    %370 = vmatpush1.msra.mxu0 0.0
    %371 = vmatprep.subr.mxu0 0.0
    %372 = vmatpush1.msra.mxu0 0.0
    %373 = vmatprep.subr.mxu0 0.0
    %374 = vmatpush1.msra.mxu0 0.0
    %375 = vmatprep.subr.mxu0 0.0
    %376 = vmatpush1.msra.mxu0 0.0
    %377 = vmatprep.subr.mxu0 0.0
    %378 = vmatpush1.msra.mxu0 0.0
    %379 = vmatprep.subr.mxu0 0.0
    %380 = vmatpush1.msra.mxu0 0.0
    %381 = vmatprep.subr.mxu0 0.0
    %382 = vmatpush1.msra.mxu0 0.0
    %383 = vmatprep.subr.mxu0 0.0
    %384 = vmatpush1.msra.mxu0 0.0
    %385 = vmatprep.subr.mxu0 0.0
    %386 = vmatpush1.msra.mxu0 0.0
    %387 = vmatprep.subr.mxu0 0.0
    %388 = vmatpush1.msra.mxu0 0.0
    %389 = vmatprep.subr.mxu0 0.0
    %390 = vmatpush1.msra.mxu0 0.0
    %391 = vmatprep.subr.mxu0 %v317
    %392 = vmatpush1.msra.mxu0 %v316
    %393 = vmatprep.subr.mxu0 %v310
    %394 = vmatpush1.msra.mxu0 %v309
    %395 = vmatprep.subr.mxu0 0.0
    %396 = vmatpush2.msra.mxu0 0.0
    %397 = vmatprep.subr.mxu0 0.0
    %398 = vmatpush2.msra.mxu0 0.0
    %399 = vmatprep.subr.mxu0 0.0
    %400 = vmatpush2.msra.mxu0 0.0
    %401 = vmatprep.subr.mxu0 0.0
    %402 = vmatpush2.msra.mxu0 0.0
    %403 = vmatprep.subr.mxu0 0.0
    %404 = vmatpush2.msra.mxu0 0.0
    %405 = vmatprep.subr.mxu0 0.0
    %406 = vmatpush2.msra.mxu0 0.0
    %407 = vmatprep.subr.mxu0 0.0
    %408 = vmatpush2.msra.mxu0 0.0
    %409 = vmatprep.subr.mxu0 0.0
    %410 = vmatpush2.msra.mxu0 0.0
    %411 = vmatprep.subr.mxu0 0.0
    %412 = vmatpush2.msra.mxu0 0.0
    %413 = vmatprep.subr.mxu0 0.0
    %414 = vmatpush2.msra.mxu0 0.0
    %415 = vmatprep.subr.mxu0 0.0
    %416 = vmatpush2.msra.mxu0 0.0
    %417 = vmatprep.subr.mxu0 0.0
    %418 = vmatpush2.msra.mxu0 0.0
    %419 = vmatprep.subr.mxu0 0.0
    %420 = vmatpush2.msra.mxu0 0.0
    %421 = vmatprep.subr.mxu0 0.0
    %422 = vmatpush2.msra.mxu0 0.0
    %423 = vmatprep.subr.mxu0 0.0
    %424 = vmatpush2.msra.mxu0 0.0
    %425 = vmatprep.subr.mxu0 0.0
    %426 = vmatpush2.msra.mxu0 0.0
    %427 = vmatprep.mubr.f32.mxu0 0.0
    %428 = vmatmul.mubr.f32.gmra.mxu0 %v361
    %v429 = vpop.f32.mrf.mxu0
    %v430 = vadd.f32 %v328, %v429
    %v431 = vpop.f32.mrf.mxu0
    %v432 = vadd.f32 %v332, %v431
    %433 = vdwg.mxu0
    %434 = vmatprep.subr.mxu0 0.0
    %435 = vmatpush1.msra.mxu0 0.0
    %436 = vmatprep.subr.mxu0 0.0
    %437 = vmatpush1.msra.mxu0 0.0
    %438 = vmatprep.subr.mxu0 0.0
    %439 = vmatpush1.msra.mxu0 0.0
    %440 = vmatprep.subr.mxu0 0.0
    %441 = vmatpush1.msra.mxu0 0.0
    %442 = vmatprep.subr.mxu0 0.0
    %443 = vmatpush1.msra.mxu0 0.0
    %444 = vmatprep.subr.mxu0 0.0
    %445 = vmatpush1.msra.mxu0 0.0
    %446 = vmatprep.subr.mxu0 0.0
    %447 = vmatpush1.msra.mxu0 0.0
    %448 = vmatprep.subr.mxu0 0.0
    %449 = vmatpush1.msra.mxu0 0.0
    %450 = vmatprep.subr.mxu0 0.0
    %451 = vmatpush1.msra.mxu0 0.0
    %452 = vmatprep.subr.mxu0 0.0
    %453 = vmatpush1.msra.mxu0 0.0
    %454 = vmatprep.subr.mxu0 0.0
    %455 = vmatpush1.msra.mxu0 0.0
    %456 = vmatprep.subr.mxu0 0.0
    %457 = vmatpush1.msra.mxu0 0.0
    %458 = vmatprep.subr.mxu0 0.0
    %459 = vmatpush1.msra.mxu0 0.0
    %460 = vmatprep.subr.mxu0 0.0
    %461 = vmatpush1.msra.mxu0 0.0
    %462 = vmatprep.subr.mxu0 %v319
    %463 = vmatpush1.msra.mxu0 %v318
    %464 = vmatprep.subr.mxu0 %v312
    %465 = vmatpush1.msra.mxu0 %v311
    %466 = vmatprep.subr.mxu0 0.0
    %467 = vmatpush2.msra.mxu0 0.0
    %468 = vmatprep.subr.mxu0 0.0
    %469 = vmatpush2.msra.mxu0 0.0
    %470 = vmatprep.subr.mxu0 0.0
    %471 = vmatpush2.msra.mxu0 0.0
    %472 = vmatprep.subr.mxu0 0.0
    %473 = vmatpush2.msra.mxu0 0.0
    %474 = vmatprep.subr.mxu0 0.0
    %475 = vmatpush2.msra.mxu0 0.0
    %476 = vmatprep.subr.mxu0 0.0
    %477 = vmatpush2.msra.mxu0 0.0
    %478 = vmatprep.subr.mxu0 0.0
    %479 = vmatpush2.msra.mxu0 0.0
    %480 = vmatprep.subr.mxu0 0.0
    %481 = vmatpush2.msra.mxu0 0.0
    %482 = vmatprep.subr.mxu0 0.0
    %483 = vmatpush2.msra.mxu0 0.0
    %484 = vmatprep.subr.mxu0 0.0
    %485 = vmatpush2.msra.mxu0 0.0
    %486 = vmatprep.subr.mxu0 0.0
    %487 = vmatpush2.msra.mxu0 0.0
    %488 = vmatprep.subr.mxu0 0.0
    %489 = vmatpush2.msra.mxu0 0.0
    %490 = vmatprep.subr.mxu0 0.0
    %491 = vmatpush2.msra.mxu0 0.0
    %492 = vmatprep.subr.mxu0 0.0
    %493 = vmatpush2.msra.mxu0 0.0
    %494 = vmatprep.subr.mxu0 0.0
    %495 = vmatpush2.msra.mxu0 0.0
    %496 = vmatprep.subr.mxu0 0.0
    %497 = vmatpush2.msra.mxu0 0.0
    %498 = vmatprep.mubr.f32.mxu0 0.0
    %499 = vmatmul.mubr.f32.gmra.mxu0 %v361
    %v500 = vpop.f32.mrf.mxu0
    %v501 = vadd.f32 %v336, %v500
    %v502 = vpop.f32.mrf.mxu0
    %v503 = vadd.f32 %v340, %v502
    %504 = vdwg.mxu0
    %505 = vmatprep.subr.mxu0 0.0
    %506 = vmatpush1.msra.mxu0 0.0
    %507 = vmatprep.subr.mxu0 0.0
    %508 = vmatpush1.msra.mxu0 0.0
    %509 = vmatprep.subr.mxu0 0.0
    %510 = vmatpush1.msra.mxu0 0.0
    %511 = vmatprep.subr.mxu0 0.0
    %512 = vmatpush1.msra.mxu0 0.0
    %513 = vmatprep.subr.mxu0 0.0
    %514 = vmatpush1.msra.mxu0 0.0
    %515 = vmatprep.subr.mxu0 0.0
    %516 = vmatpush1.msra.mxu0 0.0
    %517 = vmatprep.subr.mxu0 0.0
    %518 = vmatpush1.msra.mxu0 0.0
    %519 = vmatprep.subr.mxu0 0.0
    %520 = vmatpush1.msra.mxu0 0.0
    %521 = vmatprep.subr.mxu0 0.0
    %522 = vmatpush1.msra.mxu0 0.0
    %523 = vmatprep.subr.mxu0 0.0
    %524 = vmatpush1.msra.mxu0 0.0
    %525 = vmatprep.subr.mxu0 0.0
    %526 = vmatpush1.msra.mxu0 0.0
    %527 = vmatprep.subr.mxu0 0.0
    %528 = vmatpush1.msra.mxu0 0.0
    %529 = vmatprep.subr.mxu0 0.0
    %530 = vmatpush1.msra.mxu0 0.0
    %531 = vmatprep.subr.mxu0 0.0
    %532 = vmatpush1.msra.mxu0 0.0
    %533 = vmatprep.subr.mxu0 %v321
    %534 = vmatpush1.msra.mxu0 %v320
    %535 = vmatprep.subr.mxu0 %v314
    %536 = vmatpush1.msra.mxu0 %v313
    %537 = vmatprep.subr.mxu0 0.0
    %538 = vmatpush2.msra.mxu0 0.0
    %539 = vmatprep.subr.mxu0 0.0
    %540 = vmatpush2.msra.mxu0 0.0
    %541 = vmatprep.subr.mxu0 0.0
    %542 = vmatpush2.msra.mxu0 0.0
    %543 = vmatprep.subr.mxu0 0.0
    %544 = vmatpush2.msra.mxu0 0.0
    %545 = vmatprep.subr.mxu0 0.0
    %546 = vmatpush2.msra.mxu0 0.0
    %547 = vmatprep.subr.mxu0 0.0
    %548 = vmatpush2.msra.mxu0 0.0
    %549 = vmatprep.subr.mxu0 0.0
    %550 = vmatpush2.msra.mxu0 0.0
    %551 = vmatprep.subr.mxu0 0.0
    %552 = vmatpush2.msra.mxu0 0.0
    %553 = vmatprep.subr.mxu0 0.0
    %554 = vmatpush2.msra.mxu0 0.0
    %555 = vmatprep.subr.mxu0 0.0
    %556 = vmatpush2.msra.mxu0 0.0
    %557 = vmatprep.subr.mxu0 0.0
    %558 = vmatpush2.msra.mxu0 0.0
    %559 = vmatprep.subr.mxu0 0.0
    %560 = vmatpush2.msra.mxu0 0.0
    %561 = vmatprep.subr.mxu0 0.0
    %562 = vmatpush2.msra.mxu0 0.0
    %563 = vmatprep.subr.mxu0 0.0
    %564 = vmatpush2.msra.mxu0 0.0
    %565 = vmatprep.subr.mxu0 0.0
    %566 = vmatpush2.msra.mxu0 0.0
    %567 = vmatprep.subr.mxu0 0.0
    %568 = vmatpush2.msra.mxu0 0.0
    %569 = vmatprep.mubr.f32.mxu0 0.0
    %570 = vmatmul.mubr.f32.gmra.mxu0 %v361
    %v571 = vpop.f32.mrf.mxu0
    %v572 = vadd.f32 %v344, %v571
    %v573 = vpop.f32.mrf.mxu0
    %v574 = vadd.f32 %v348, %v573
    %575 = vdwg.mxu0
    %576 = vmatprep.subr.mxu0 0.0
    %577 = vmatpush1.msra.mxu0 0.0
    %578 = vmatprep.subr.mxu0 0.0
    %579 = vmatpush1.msra.mxu0 0.0
    %580 = vmatprep.subr.mxu0 0.0
    %581 = vmatpush1.msra.mxu0 0.0
    %582 = vmatprep.subr.mxu0 0.0
    %583 = vmatpush1.msra.mxu0 0.0
    %584 = vmatprep.subr.mxu0 0.0
    %585 = vmatpush1.msra.mxu0 0.0
    %586 = vmatprep.subr.mxu0 0.0
    %587 = vmatpush1.msra.mxu0 0.0
    %588 = vmatprep.subr.mxu0 0.0
    %589 = vmatpush1.msra.mxu0 0.0
    %590 = vmatprep.subr.mxu0 0.0
    %591 = vmatpush1.msra.mxu0 0.0
    %592 = vmatprep.subr.mxu0 0.0
    %593 = vmatpush1.msra.mxu0 0.0
    %594 = vmatprep.subr.mxu0 0.0
    %595 = vmatpush1.msra.mxu0 0.0
    %596 = vmatprep.subr.mxu0 0.0
    %597 = vmatpush1.msra.mxu0 0.0
    %598 = vmatprep.subr.mxu0 0.0
    %599 = vmatpush1.msra.mxu0 0.0
    %600 = vmatprep.subr.mxu0 0.0
    %601 = vmatpush1.msra.mxu0 0.0
    %602 = vmatprep.subr.mxu0 0.0
    %603 = vmatpush1.msra.mxu0 0.0
    %604 = vmatprep.subr.mxu0 0.0
    %605 = vmatpush1.msra.mxu0 %v322
    %606 = vmatprep.subr.mxu0 0.0
    %607 = vmatpush1.msra.mxu0 %v315
    %608 = vmatprep.subr.mxu0 0.0
    %609 = vmatpush2.msra.mxu0 0.0
    %610 = vmatprep.subr.mxu0 0.0
    %611 = vmatpush2.msra.mxu0 0.0
    %612 = vmatprep.subr.mxu0 0.0
    %613 = vmatpush2.msra.mxu0 0.0
    %614 = vmatprep.subr.mxu0 0.0
    %615 = vmatpush2.msra.mxu0 0.0
    %616 = vmatprep.subr.mxu0 0.0
    %617 = vmatpush2.msra.mxu0 0.0
    %618 = vmatprep.subr.mxu0 0.0
    %619 = vmatpush2.msra.mxu0 0.0
    %620 = vmatprep.subr.mxu0 0.0
    %621 = vmatpush2.msra.mxu0 0.0
    %622 = vmatprep.subr.mxu0 0.0
    %623 = vmatpush2.msra.mxu0 0.0
    %624 = vmatprep.subr.mxu0 0.0
    %625 = vmatpush2.msra.mxu0 0.0
    %626 = vmatprep.subr.mxu0 0.0
    %627 = vmatpush2.msra.mxu0 0.0
    %628 = vmatprep.subr.mxu0 0.0
    %629 = vmatpush2.msra.mxu0 0.0
    %630 = vmatprep.subr.mxu0 0.0
    %631 = vmatpush2.msra.mxu0 0.0
    %632 = vmatprep.subr.mxu0 0.0
    %633 = vmatpush2.msra.mxu0 0.0
    %634 = vmatprep.subr.mxu0 0.0
    %635 = vmatpush2.msra.mxu0 0.0
    %636 = vmatprep.subr.mxu0 0.0
    %637 = vmatpush2.msra.mxu0 0.0
    %638 = vmatprep.subr.mxu0 0.0
    %639 = vmatpush2.msra.mxu0 0.0
    %640 = vmatprep.mubr.f32.mxu0 0.0
    %641 = vmatmul.mubr.f32.gmra.mxu0 %v361
    %v642 = vpop.f32.mrf.mxu0
    %v643 = vadd.f32 %v352, %v642
    %v644 = vpop.f32.mrf.mxu0
    %645 = vdwg.mxu0
    %v646 = vsub.f32 0.0, %v430
    %v647 = vsub.f32 0.0, %v432
    %v648 = vsub.f32 0.0, %v501
    %v649 = vsub.f32 0.0, %v503
    %v650 = vsub.f32 0.0, %v572
    %v651 = vsub.f32 0.0, %v574
    %v652 = vsub.f32 0.0, %v643
    %v653 = vmul.f32 %v646, 1.442695
    %v654 = vpow.pop %v653
    %v655 = vmul.f32 %v647, 1.442695
    %v656 = vpow.pop %v655
    %v657 = vmul.f32 %v648, 1.442695
    %v658 = vpow.pop %v657
    %v659 = vmul.f32 %v649, 1.442695
    %v660 = vpow.pop %v659
    %v661 = vmul.f32 %v650, 1.442695
    %v662 = vpow.pop %v661
    %v663 = vmul.f32 %v651, 1.442695
    %v664 = vpow.pop %v663
    %v665 = vmul.f32 %v652, 1.442695
    %v666 = vpow.pop %v665
    %v667 = vadd.f32 %v654, 1.0
    %v668 = vadd.f32 %v656, 1.0
    %v669 = vadd.f32 %v658, 1.0
    %v670 = vadd.f32 %v660, 1.0
    %v671 = vadd.f32 %v662, 1.0
    %v672 = vadd.f32 %v664, 1.0
    %v673 = vadd.f32 %v666, 1.0
    %v674 = vrcp.pop %v667
    %v675 = vmul.f32 1.0, %v674
    %v676 = vrcp.pop %v668
    %v677 = vmul.f32 1.0, %v676
    %v678 = vrcp.pop %v669
    %v679 = vmul.f32 1.0, %v678
    %v680 = vrcp.pop %v670
    %v681 = vmul.f32 1.0, %v680
    %v682 = vrcp.pop %v671
    %v683 = vmul.f32 1.0, %v682
    %v684 = vrcp.pop %v672
    %v685 = vmul.f32 1.0, %v684
    %v686 = vrcp.pop %v673
    %v687 = vmul.f32 1.0, %v686
    %688 = vst [vmem:[#allocation2] sm:$0xff] %v675
    %689 = vst [vmem:[#allocation2 + $0x8] sm:$0xff] %v677
    %690 = vst [vmem:[#allocation2 + $0x10] sm:$0xff] %v679
    %691 = vst [vmem:[#allocation2 + $0x18] sm:$0xff] %v681
    %692 = vst [vmem:[#allocation2 + $0x20] sm:$0xff] %v683
    %693 = vst [vmem:[#allocation2 + $0x28] sm:$0xff] %v685
    %694 = vst.msk [vmem:[#allocation2 + $0x30] sm:$0xff] %vm271, %v687
    // Predicated region
    $region46: #{tpu_custom_call.1} parent=1 // pred_check
      _
    $region47: #{tpu_custom_call.1} parent=1 // pred_check_branch
      %696 = sbr.rel (0) target = $region49
    $region48: #{tpu_custom_call.1} parent=1 // pred_region
      %s698 = ssub.s32 896, 896
      %699 = vsyncadd [#allocation3], %s698
      %s701 = sshll.u32 [#allocation2], 4
      %s702 = int_to_ptr.vmem [resolvable:$true] %s701
      %704 = dma.vmem_to_hbm [thread:$0]  %s702, 896, %s11, [#allocation3]
    $region49: #{tpu_custom_call.1} parent=1 // pred_fallthru
      _
    // Predicated region
    $region50: #{tpu_custom_call.1} parent=1 // pred_check
      _
    $region51: #{tpu_custom_call.1} parent=1 // pred_check_branch
      %706 = sbr.rel (0) target = $region53
    $region52: #{tpu_custom_call.1} parent=1 // pred_region
      %707 = dma.done [#allocation3], 896
    $region53: #{tpu_custom_call.1} parent=1 // pred_fallthru
      _
    %708 = vsyncpa [#allocation3], 1

</llo_original>
